<compile_context>
chip_gen: v7x
topology: tpu7x:2x2x1
jax: 0.10.0
libtpu: 0.0.40
codegen_flags: <defaults>
</compile_context>

<pallas_src>
import functools

import jax
import jax.numpy as jnp
import numpy as np
from jax.experimental import pallas as pl
from jax.experimental.pallas import tpu as pltpu

HIDDEN = 256


def _q_kernel(x_ref, w1_ref, b1_ref, w2_ref, b2_ref, w3_ref, b3_ref, o_ref,
              *, bf16_epilogue):
    # fc1: merged (s|a) concat -> one small-K MXU pass, f32 accumulate.
    h1 = jnp.dot(x_ref[...], w1_ref[...], preferred_element_type=jnp.float32)
    if bf16_epilogue:
        # v6e/v7x: bf16 VALU halves epilogue VALU-slot pressure; also feeds the
        # next MXU pass directly (no extra astype).
        h1 = jnp.maximum(h1.astype(jnp.bfloat16)
                         + b1_ref[...].astype(jnp.bfloat16), 0.0)
    else:
        # v5e: no bf16 VALU -> keep the epilogue in f32, cast only for the MXU.
        h1 = jnp.maximum(h1 + b1_ref[...], 0.0).astype(jnp.bfloat16)

    # fc2
    h2 = jnp.dot(h1, w2_ref[...], preferred_element_type=jnp.float32)
    if bf16_epilogue:
        h2 = jnp.maximum(h2.astype(jnp.bfloat16)
                         + b2_ref[...].astype(jnp.bfloat16), 0.0)
        h2 = h2.astype(jnp.float32)
    else:
        h2 = jnp.maximum(h2 + b2_ref[...], 0.0)

    # fc3: real output width is 1 -> skip the MXU (no 128-lane pad).
    # VPU broadcast-multiply + XLU lane reduction, f32 throughout.
    q = jnp.sum(h2 * w3_ref[...], axis=-1, keepdims=True) + b3_ref[...]
    o_ref[...] = q.astype(o_ref.dtype)          # unpadded (TB, 1) store


def pack_q_params(params):
    """One-time repack of raw f32 params (hoisted out of the hot path).

    Returns bf16 copies of the matmul weights, row-vector f32 biases, and fc3
    as a (1, H) f32 row for the in-kernel VPU reduction.
    """
    w1, b1, w2, b2, w3, b3 = params
    hidden = w2.shape[0]
    return (
        w1.astype(jnp.bfloat16),                     # (d_in, H)
        jnp.reshape(b1, (1, hidden)).astype(jnp.float32),
        w2.astype(jnp.bfloat16),                     # (H, H)
        jnp.reshape(b2, (1, hidden)).astype(jnp.float32),
        jnp.reshape(w3, (1, hidden)).astype(jnp.float32),   # fc3 row
        jnp.reshape(b3, (1, 1)).astype(jnp.float32),
    )


def q_forward(s, a, packed_params, *, state_dim, action_dim,
              tile_b=2048, bf16_epilogue=True):
    """Pallas TPU implementation of Q.forward(s, a) -> (B, 1) float32."""
    w1, b1, w2, b2, w3, b3 = packed_params
    hidden = w2.shape[0]
    d_in = state_dim + action_dim

    s = s.reshape(-1, state_dim)
    a = a.reshape(-1, action_dim)
    B = s.shape[0]
    # The concat never round-trips separately: it fuses with the cast/pad into
    # a single (B, d_in) bf16 operand.
    x = jnp.concatenate([s, a], axis=-1).astype(jnp.bfloat16)

    kernel = functools.partial(_q_kernel, bf16_epilogue=bf16_epilogue)

    def cost(rows):
        flops = 2 * rows * (d_in * hidden + hidden * hidden + hidden)
        bytes_accessed = (rows * d_in * 2                      # bf16 input
                          + rows * 4                           # f32 (rows, 1) out
                          + (d_in * hidden + hidden * hidden) * 2   # bf16 weights
                          + (3 * hidden + 1) * 4)              # f32 biases + fc3 row
        return pl.CostEstimate(flops=flops, transcendentals=0,
                               bytes_accessed=bytes_accessed)

    if B <= tile_b:
        # Single-block fast path (small batches / per-env inference): grid=(),
        # everything VMEM-resident, no pipeline setup or tile padding DMA.
        Bp = ((B + 7) // 8) * 8
        if Bp != B:
            x = jnp.pad(x, ((0, Bp - B), (0, 0)))
        vmem = pl.BlockSpec(memory_space=pltpu.MemorySpace.VMEM)
        out = pl.pallas_call(
            kernel,
            out_shape=jax.ShapeDtypeStruct((Bp, 1), jnp.float32),
            in_specs=[vmem] * 7,
            out_specs=vmem,
            compiler_params=pltpu.CompilerParams(
                vmem_limit_bytes=32 * 1024 * 1024),
            cost_estimate=cost(Bp),
        )(x, w1, b1, w2, b2, w3, b3)
        return out[:B]

    # Tiled path: 1-D "parallel" batch grid -> auto double-buffered DMA and
    # megacore / 2-TC sharding on v7x (n_tiles >= 2 here since B > tile_b).
    # tile_b=2048: ~6 MiB per-step VMEM (f32 h1/h2 + weights + buffered I/O),
    # comfortably inside the 32 MiB scoped limit on every generation.
    n_tiles = pl.cdiv(B, tile_b)
    Bp = n_tiles * tile_b
    if Bp != B:
        x = jnp.pad(x, ((0, Bp - B), (0, 0)))

    def resident(arr):  # full-extent block, same index every grid step
        return pl.BlockSpec(arr.shape, lambda i: (0, 0))

    out = pl.pallas_call(
        kernel,
        out_shape=jax.ShapeDtypeStruct((Bp, 1), jnp.float32),
        grid=(n_tiles,),
        in_specs=[
            pl.BlockSpec((tile_b, d_in), lambda i: (i, 0)),
            resident(w1), resident(b1),
            resident(w2), resident(b2),
            resident(w3), resident(b3),
        ],
        # Unpadded (tile_b, 1) output: a few masked vst into VMEM, but the HBM
        # writeback drops from 128 KiB to ~1 KiB per 256 rows vs the old
        # 128-lane padded slab.
        out_specs=pl.BlockSpec((tile_b, 1), lambda i: (i, 0)),
        compiler_params=pltpu.CompilerParams(
            dimension_semantics=("parallel",),
            vmem_limit_bytes=32 * 1024 * 1024),
        cost_estimate=cost(Bp),
    )(x, w1, b1, w2, b2, w3, b3)
    return out[:B]


def init_q_params(key, state_dim, action_dim, hidden=HIDDEN):
    """Deterministic init matching nn.Linear's U(-1/sqrt(fan_in), 1/sqrt(fan_in)).

    Weights stored transposed to [in, out] for the y = x @ W convention;
    biases are [1, out] rows.
    """
    dims = [(state_dim + action_dim, hidden), (hidden, hidden), (hidden, 1)]
    params = []
    for (fan_in, fan_out) in dims:
        key, kw, kb = jax.random.split(key, 3)
        bound = 1.0 / np.sqrt(fan_in)
        w = jax.random.uniform(kw, (fan_in, fan_out), jnp.float32, -bound, bound)
        b = jax.random.uniform(kb, (1, fan_out), jnp.float32, -bound, bound)
        params += [w, b]
    return tuple(params)


if __name__ == "__main__":
    STATE_DIM, ACTION_DIM, BATCH = 16, 8, 8

    key = jax.random.PRNGKey(0)
    k_s, k_a, k_p = jax.random.split(key, 3)

    s = jax.random.normal(k_s, (BATCH, STATE_DIM), jnp.float32)
    a = jax.random.normal(k_a, (BATCH, ACTION_DIM), jnp.float32)
    params = init_q_params(k_p, STATE_DIM, ACTION_DIM)
    packed = pack_q_params(params)

    out = q_forward(s, a, packed, state_dim=STATE_DIM, action_dim=ACTION_DIM)
    out = jax.block_until_ready(out)
    assert out.shape == (BATCH, 1)

    # Pure-JAX reference using the identical bf16-MXU / f32-accumulate /
    # bf16-epilogue / VPU-fc3 recipe as the kernel.
    w1, b1, w2, b2, w3, b3 = params
    x = jnp.concatenate([s.reshape(-1, STATE_DIM), a.reshape(-1, ACTION_DIM)], -1)
    h1 = jnp.dot(x.astype(jnp.bfloat16), w1.astype(jnp.bfloat16),
                 preferred_element_type=jnp.float32)
    h1 = jnp.maximum(h1.astype(jnp.bfloat16)
                     + b1.reshape(1, -1).astype(jnp.bfloat16), 0.0)
    h2 = jnp.dot(h1, w2.astype(jnp.bfloat16), preferred_element_type=jnp.float32)
    h2 = jnp.maximum(h2.astype(jnp.bfloat16)
                     + b2.reshape(1, -1).astype(jnp.bfloat16), 0.0)
    ref = (jnp.sum(h2.astype(jnp.float32) * w3.reshape(1, -1),
                   axis=-1, keepdims=True) + b3.reshape(1, 1))

    np.testing.assert_allclose(np.asarray(out), np.asarray(ref),
                               rtol=2e-3, atol=2e-3)
    print("KERNEL_OK")
</pallas_src>

<mosaic_0001>
module attributes {stable_mosaic.version = 11 : i64} {
  func.func @_q_kernel(%arg0: memref<8x24xbf16, #tpu.memory_space<vmem>>, %arg1: memref<24x256xbf16, #tpu.memory_space<vmem>>, %arg2: memref<1x256xf32, #tpu.memory_space<vmem>>, %arg3: memref<256x256xbf16, #tpu.memory_space<vmem>>, %arg4: memref<1x256xf32, #tpu.memory_space<vmem>>, %arg5: memref<1x256xf32, #tpu.memory_space<vmem>>, %arg6: memref<1x1xf32, #tpu.memory_space<vmem>>, %arg7: memref<8x1xf32, #tpu.memory_space<vmem>>) attributes {dimension_semantics = [], scalar_prefetch = 0 : i64, scratch_operands = 0 : i64, tpu.core_type = #tpu.core_type<tc>} {
    %c0 = arith.constant 0 : index
    %c0_0 = arith.constant 0 : index
    %0 = vector.load %arg0[%c0, %c0_0] : memref<8x24xbf16, #tpu.memory_space<vmem>>, vector<8x24xbf16>
    %c0_1 = arith.constant 0 : index
    %c0_2 = arith.constant 0 : index
    %1 = vector.load %arg1[%c0_1, %c0_2] : memref<24x256xbf16, #tpu.memory_space<vmem>>, vector<24x256xbf16>
    %cst = arith.constant dense<0.000000e+00> : vector<8x256xf32>
    %2 = tpu.matmul %0, %1, %cst {dimension_numbers = #tpu.dot_dimension_numbers<[1], [0], [0], [1], [0, 0, 1, 1], [], []>} : vector<8x24xbf16>, vector<24x256xbf16>, vector<8x256xf32> -> vector<8x256xf32>
    %3 = arith.truncf %2 : vector<8x256xf32> to vector<8x256xbf16>
    %c0_3 = arith.constant 0 : index
    %c0_4 = arith.constant 0 : index
    %4 = vector.load %arg2[%c0_3, %c0_4] : memref<1x256xf32, #tpu.memory_space<vmem>>, vector<1x256xf32>
    %5 = arith.truncf %4 : vector<1x256xf32> to vector<1x256xbf16>
    %6 = vector.broadcast %5 : vector<1x256xbf16> to vector<8x256xbf16>
    %7 = arith.addf %3, %6 : vector<8x256xbf16>
    %cst_5 = arith.constant 0.000000e+00 : bf16
    %8 = vector.broadcast %cst_5 : bf16 to vector<8x256xbf16>
    %9 = arith.maximumf %7, %8 : vector<8x256xbf16>
    %c0_6 = arith.constant 0 : index
    %c0_7 = arith.constant 0 : index
    %10 = vector.load %arg3[%c0_6, %c0_7] : memref<256x256xbf16, #tpu.memory_space<vmem>>, vector<256x256xbf16>
    %cst_8 = arith.constant dense<0.000000e+00> : vector<8x256xf32>
    %11 = tpu.matmul %9, %10, %cst_8 {dimension_numbers = #tpu.dot_dimension_numbers<[1], [0], [0], [1], [0, 0, 1, 1], [], []>} : vector<8x256xbf16>, vector<256x256xbf16>, vector<8x256xf32> -> vector<8x256xf32>
    %12 = arith.truncf %11 : vector<8x256xf32> to vector<8x256xbf16>
    %c0_9 = arith.constant 0 : index
    %c0_10 = arith.constant 0 : index
    %13 = vector.load %arg4[%c0_9, %c0_10] : memref<1x256xf32, #tpu.memory_space<vmem>>, vector<1x256xf32>
    %14 = arith.truncf %13 : vector<1x256xf32> to vector<1x256xbf16>
    %15 = vector.broadcast %14 : vector<1x256xbf16> to vector<8x256xbf16>
    %16 = arith.addf %12, %15 : vector<8x256xbf16>
    %cst_11 = arith.constant 0.000000e+00 : bf16
    %17 = vector.broadcast %cst_11 : bf16 to vector<8x256xbf16>
    %18 = arith.maximumf %16, %17 : vector<8x256xbf16>
    %19 = arith.extf %18 : vector<8x256xbf16> to vector<8x256xf32>
    %c0_12 = arith.constant 0 : index
    %c0_13 = arith.constant 0 : index
    %20 = vector.load %arg5[%c0_12, %c0_13] : memref<1x256xf32, #tpu.memory_space<vmem>>, vector<1x256xf32>
    %21 = vector.broadcast %20 : vector<1x256xf32> to vector<8x256xf32>
    %22 = arith.mulf %19, %21 : vector<8x256xf32>
    %cst_14 = arith.constant dense<0.000000e+00> : vector<8xf32>
    %23 = vector.multi_reduction <add>, %22, %cst_14 [1] : vector<8x256xf32> to vector<8xf32>
    %24 = vector.shape_cast %23 : vector<8xf32> to vector<8x1xf32>
    %c0_15 = arith.constant 0 : index
    %c0_16 = arith.constant 0 : index
    %25 = vector.load %arg6[%c0_15, %c0_16] : memref<1x1xf32, #tpu.memory_space<vmem>>, vector<1x1xf32>
    %26 = vector.broadcast %25 : vector<1x1xf32> to vector<8x1xf32>
    %27 = arith.addf %24, %26 : vector<8x1xf32>
    %c0_17 = arith.constant 0 : index
    %c0_18 = arith.constant 0 : index
    %28 = vector.load %arg7[%c0_17, %c0_18] : memref<8x1xf32, #tpu.memory_space<vmem>>, vector<8x1xf32>
    tpu.vector_store %arg7[%c0_17, %c0_18], %27 {strides = array<i32>} : memref<8x1xf32, #tpu.memory_space<vmem>>, vector<8x1xf32>,
    return
  }
}

</mosaic_0001>

<llo_original>
// kernel: tpu_custom_call.1
$region0: #{tpu_custom_call.1}
  #allocation0 [shape = 'u32[]', space=smem, size = 0x4, offset = 0x4, fixed_abs, tag = 'smem constant byte address 0x4 - core index']
  #allocation1 [shape = 'u32[144,128]{1,0:T(1,128)}', space=vmem, size = 0x12000, scoped, tag = 'internal scratch']
  #allocation2 [shape = 'f32[1,1]{1,0:T(1,128)S(1)}', space=vmem, size = 0x200, scoped, tag = 'scoped memory for tpu_custom_call.1']
  %s0 = inlined_call_operand.hbm [shape: bf16[8,24], index: 0, kind: input, shape index: {}]
  %s1 = inlined_call_operand.hbm [shape: bf16[24,256], index: 1, kind: input, shape index: {}]
  %s2 = inlined_call_operand.vmem [shape: f32[1,256], index: 2, kind: input, shape index: {}]
  %s3 = inlined_call_operand.hbm [shape: bf16[256,256], index: 3, kind: input, shape index: {}]
  %s4 = inlined_call_operand.vmem [shape: f32[1,256], index: 4, kind: input, shape index: {}]
  %s5 = inlined_call_operand.vmem [shape: f32[1,256], index: 5, kind: input, shape index: {}]
  %s6 = inlined_call_operand.<no memory space> [shape: f32[1,1], index: 6, kind: input, shape index: {}]
  %s7 = inlined_call_operand.vmem [shape: f32[8,1], index: 7, kind: output, shape index: {}]
  %s8 = sld [smem:[#allocation0]]
  $region50: #{tpu_custom_call.1} parent=0
    _
  %s10 = ssub.s32 1, %s8
  %s11 = scalar_select 0, %s10, %s8
  %v12 = vstv %s6
  %13 = vst [vmem:[#allocation2] sm:$0x1] %v12
  $region1: #{tpu_custom_call.1} parent=0
    #allocation3 [shape = 'u8[2048]{0}', space=vmem, size = 0x800, scoped, tag = 'input window, operand 0, single buffered']
    #allocation4 [shape = 's32[1]{0}', space=sflag, size = 0x4, scoped, tag = 'scoped memory for tpu_custom_call.1']
    #allocation5 [shape = 'u8[12288]{0}', space=vmem, size = 0x3000, scoped, tag = 'input window, operand 1, single buffered']
    #allocation6 [shape = 's32[1]{0}', space=sflag, size = 0x4, scoped, tag = 'scoped memory for tpu_custom_call.1']
    #allocation7 [shape = 'u8[131072]{0}', space=vmem, size = 0x20000, scoped, tag = 'input window, operand 3, single buffered']
    %14 = vsyncpa [#allocation4], 0
    %15 = vsyncpa [#allocation6], 0
    // Predicated region
    $region2: #{tpu_custom_call.1} parent=1 // pred_check
      _
    $region3: #{tpu_custom_call.1} parent=1 // pred_check_branch
      %17 = sbr.rel (0) target = $region5
    $region4: #{tpu_custom_call.1} parent=1 // pred_region
      %s19 = ssub.s32 64, 64
      %20 = vsyncadd [#allocation4], %s19
      %s22 = sshll.u32 [#allocation3], 4
      %s23 = int_to_ptr.vmem [resolvable:$true] %s22
      %25 = dma.hbm_to_vmem [thread:$0]  %s0, 64, %s23, [#allocation4]
    $region5: #{tpu_custom_call.1} parent=1 // pred_fallthru
      _
    // Predicated region
    $region6: #{tpu_custom_call.1} parent=1 // pred_check
      _
    $region7: #{tpu_custom_call.1} parent=1 // pred_check_branch
      %27 = sbr.rel (0) target = $region9
    $region8: #{tpu_custom_call.1} parent=1 // pred_region
      %s29 = ssub.s32 384, 384
      %30 = vsyncadd [#allocation6], %s29
      %s31 = sshll.u32 [#allocation5], 4
      %s32 = int_to_ptr.vmem [resolvable:$true] %s31
      %37 = dma.hbm_to_vmem [thread:$0]  %s1, 384, %s32, [#allocation6], 128, 128, 8
    $region9: #{tpu_custom_call.1} parent=1 // pred_fallthru
      _
    // Predicated region
    $region10: #{tpu_custom_call.1} parent=1 // pred_check
      _
    $region11: #{tpu_custom_call.1} parent=1 // pred_check_branch
      %39 = sbr.rel (0) target = $region13
    $region12: #{tpu_custom_call.1} parent=1 // pred_region
      _
    $region13: #{tpu_custom_call.1} parent=1 // pred_fallthru
      _
    // Predicated region
    $region14: #{tpu_custom_call.1} parent=1 // pred_check
      _
    $region15: #{tpu_custom_call.1} parent=1 // pred_check_branch
      %41 = sbr.rel (0) target = $region17
    $region16: #{tpu_custom_call.1} parent=1 // pred_region
      %s43 = ssub.s32 4096, 4096
      %44 = vsyncadd [#allocation6], %s43
      %s45 = sshll.u32 [#allocation7], 4
      %s46 = int_to_ptr.vmem [resolvable:$true] %s45
      %51 = dma.hbm_to_vmem [thread:$0]  %s3, 4096, %s46, [#allocation6], 128, 128, 8
    $region17: #{tpu_custom_call.1} parent=1 // pred_fallthru
      _
    // Predicated region
    $region18: #{tpu_custom_call.1} parent=1 // pred_check
      _
    $region19: #{tpu_custom_call.1} parent=1 // pred_check_branch
      %53 = sbr.rel (0) target = $region21
    $region20: #{tpu_custom_call.1} parent=1 // pred_region
      _
    $region21: #{tpu_custom_call.1} parent=1 // pred_fallthru
      _
    // Predicated region
    $region22: #{tpu_custom_call.1} parent=1 // pred_check
      _
    $region23: #{tpu_custom_call.1} parent=1 // pred_check_branch
      %55 = sbr.rel (0) target = $region25
    $region24: #{tpu_custom_call.1} parent=1 // pred_region
      _
    $region25: #{tpu_custom_call.1} parent=1 // pred_fallthru
      _
    // Predicated region
    $region26: #{tpu_custom_call.1} parent=1 // pred_check
      _
    $region27: #{tpu_custom_call.1} parent=1 // pred_check_branch
      %57 = sbr.rel (0) target = $region29
    $region28: #{tpu_custom_call.1} parent=1 // pred_region
      _
    $region29: #{tpu_custom_call.1} parent=1 // pred_fallthru
      _
    // Predicated region
    $region30: #{tpu_custom_call.1} parent=1 // pred_check
      _
    $region31: #{tpu_custom_call.1} parent=1 // pred_check_branch
      %59 = sbr.rel (0) target = $region33
    $region32: #{tpu_custom_call.1} parent=1 // pred_region
      %60 = dma.done [#allocation4], 64
    $region33: #{tpu_custom_call.1} parent=1 // pred_fallthru
      _
    // Predicated region
    $region34: #{tpu_custom_call.1} parent=1 // pred_check
      _
    $region35: #{tpu_custom_call.1} parent=1 // pred_check_branch
      %62 = sbr.rel (0) target = $region37
    $region36: #{tpu_custom_call.1} parent=1 // pred_region
      %63 = dma.done [#allocation6], 384
    $region37: #{tpu_custom_call.1} parent=1 // pred_fallthru
      _
    // Predicated region
    $region38: #{tpu_custom_call.1} parent=1 // pred_check
      _
    $region39: #{tpu_custom_call.1} parent=1 // pred_check_branch
      %65 = sbr.rel (0) target = $region41
    $region40: #{tpu_custom_call.1} parent=1 // pred_region
      %66 = dma.done [#allocation6], 4096
    $region41: #{tpu_custom_call.1} parent=1 // pred_fallthru
      _
    %v68 = vld [vmem:[#allocation3] sm:$0xf]
    %v69 = vld [vmem:[#allocation5] sm:$0xff]
    %v70 = vld [vmem:[#allocation5 + $0x8] sm:$0xff]
    %v71 = vld [vmem:[#allocation5 + $0x10] sm:$0xff]
    %v75 = vunpack.c.l.b16 %v69
    %v76 = vunpack.c.h.b16 %v69
    %v77 = vunpack.c.l.b16 %v70
    %v78 = vunpack.c.h.b16 %v70
    %v79 = vunpack.c.l.b16 %v71
    %v80 = vunpack.c.h.b16 %v71
    %v81 = vpack.c.b16 %v77, %v75
    %v82 = vpack.c.b16 %v78, %v76
    %v83 = vpack.c.b16 %v79, %v79
    %v84 = vpack.c.b16 %v80, %v80
    %vm87 = vcmask 195584
    %v89 = vsel %vm87, %v68, 0
    %vm91 = vcmask 1043456
    %v93 = vsel %vm91, %v83, 0
    %v96 = vsel %vm91, %v84, 0
    %98 = vmatprep.subr.bf16.mxu0 %v82
    %99 = vmatpush1.bf16.msra.mxu0 %v81
    %100 = vmatprep.subr.bf16.mxu0 %v96
    %101 = vmatpush1.bf16.msra.mxu0 %v93
    %102 = vmatprep.subr.bf16.mxu0 0
    %103 = vmatpush1.bf16.msra.mxu0 0
    %104 = vmatprep.subr.bf16.mxu0 0
    %105 = vmatpush1.bf16.msra.mxu0 0
    %106 = vmatprep.subr.bf16.mxu0 0
    %107 = vmatpush1.bf16.msra.mxu0 0
    %108 = vmatprep.subr.bf16.mxu0 0
    %109 = vmatpush1.bf16.msra.mxu0 0
    %110 = vmatprep.subr.bf16.mxu0 0
    %111 = vmatpush1.bf16.msra.mxu0 0
    %112 = vmatprep.subr.bf16.mxu0 0
    %113 = vmatpush1.bf16.msra.mxu0 0
    %114 = vmatprep.subr.bf16.mxu0 0
    %115 = vmatpush1.bf16.msra.mxu0 0
    %116 = vmatprep.subr.bf16.mxu0 0
    %117 = vmatpush1.bf16.msra.mxu0 0
    %118 = vmatprep.subr.bf16.mxu0 0
    %119 = vmatpush1.bf16.msra.mxu0 0
    %120 = vmatprep.subr.bf16.mxu0 0
    %121 = vmatpush1.bf16.msra.mxu0 0
    %122 = vmatprep.subr.bf16.mxu0 0
    %123 = vmatpush1.bf16.msra.mxu0 0
    %124 = vmatprep.subr.bf16.mxu0 0
    %125 = vmatpush1.bf16.msra.mxu0 0
    %126 = vmatprep.subr.bf16.mxu0 0
    %127 = vmatpush1.bf16.msra.mxu0 0
    %128 = vmatprep.subr.bf16.mxu0 0
    %129 = vmatpush1.bf16.msra.mxu0 0
    %130 = vmatprep.mubr.bf16.mxu0 0
    %131 = vmatmul.mubr.bf16.gmra.mrb[0].mxu0 %v89
    %v132 = vpop.f32.mrb[0].mxu0
    %v133 = vadd.f32 0.0, %v132
    %v134 = vpop.f32.mrb[0].mxu0
    %v135 = vadd.f32 0.0, %v134
    %v136 = vpop.f32.mrb[0].mxu0
    %v137 = vpop.f32.mrb[0].mxu0
    %138 = vdwg.mxu0
    %v139 = vpack.c.bf16 %v133, %v133
    %v140 = vpack.c.bf16 %v135, %v135
    %v141 = vld [vmem:[%s2] sm:$0x3]
    %v143 = vlaneseq
    %v144 = vshrl.u32 %v143, 7
    %v145 = vsub.s32 0, %v144
    %v146 = vrot.slane %v141, %v145
    %v147 = vlaneseq
    %v148 = vshrl.u32 %v147, 7
    %v149 = vsub.s32 1, %v148
    %v150 = vrot.slane %v141, %v149
    %v153 = vpack.c.bf16 %v146, %v146
    %v154 = vpack.c.bf16 %v150, %v150
    %v156 = vpack.i.b16 %v153, %v153
    %v158 = vlaneseq
    %v159 = vshrl.u32 %v158, 7
    %v160 = vsub.s32 0, %v159
    %v161 = vrot.slane %v156, %v160
    %v163 = vpack.i.b16 %v154, %v154
    %v165 = vlaneseq
    %v166 = vshrl.u32 %v165, 7
    %v167 = vsub.s32 0, %v166
    %v168 = vrot.slane %v163, %v167
    %v169 = vadd.bf16 %v139, %v161
    %v170 = vadd.bf16 %v140, %v168
    %v171 = vmax.bf16 %v169, 0
    %v172 = vmax.bf16 %v170, 0
    %v173 = vld [vmem:[#allocation7] sm:$0xff]
    %v174 = vld [vmem:[#allocation7 + $0x8] sm:$0xff]
    %v175 = vld [vmem:[#allocation7 + $0x10] sm:$0xff]
    %v176 = vld [vmem:[#allocation7 + $0x18] sm:$0xff]
    %v177 = vld [vmem:[#allocation7 + $0x20] sm:$0xff]
    %v178 = vld [vmem:[#allocation7 + $0x28] sm:$0xff]
    %v179 = vld [vmem:[#allocation7 + $0x30] sm:$0xff]
    %v180 = vld [vmem:[#allocation7 + $0x38] sm:$0xff]
    %v181 = vld [vmem:[#allocation7 + $0x40] sm:$0xff]
    %v182 = vld [vmem:[#allocation7 + $0x48] sm:$0xff]
    %v183 = vld [vmem:[#allocation7 + $0x50] sm:$0xff]
    %v184 = vld [vmem:[#allocation7 + $0x58] sm:$0xff]
    %v185 = vld [vmem:[#allocation7 + $0x60] sm:$0xff]
    %v186 = vld [vmem:[#allocation7 + $0x68] sm:$0xff]
    %v187 = vld [vmem:[#allocation7 + $0x70] sm:$0xff]
    %v188 = vld [vmem:[#allocation7 + $0x78] sm:$0xff]
    %v189 = vld [vmem:[#allocation7 + $0x80] sm:$0xff]
    %v190 = vld [vmem:[#allocation7 + $0x88] sm:$0xff]
    %v191 = vld [vmem:[#allocation7 + $0x90] sm:$0xff]
    %v192 = vld [vmem:[#allocation7 + $0x98] sm:$0xff]
    %v193 = vld [vmem:[#allocation7 + $0xa0] sm:$0xff]
    %v194 = vld [vmem:[#allocation7 + $0xa8] sm:$0xff]
    %v195 = vld [vmem:[#allocation7 + $0xb0] sm:$0xff]
    %v196 = vld [vmem:[#allocation7 + $0xb8] sm:$0xff]
    %v197 = vld [vmem:[#allocation7 + $0xc0] sm:$0xff]
    %v198 = vld [vmem:[#allocation7 + $0xc8] sm:$0xff]
    %v199 = vld [vmem:[#allocation7 + $0xd0] sm:$0xff]
    %v200 = vld [vmem:[#allocation7 + $0xd8] sm:$0xff]
    %v201 = vld [vmem:[#allocation7 + $0xe0] sm:$0xff]
    %v202 = vld [vmem:[#allocation7 + $0xe8] sm:$0xff]
    %v203 = vld [vmem:[#allocation7 + $0xf0] sm:$0xff]
    %v204 = vld [vmem:[#allocation7 + $0xf8] sm:$0xff]
    %v237 = vunpack.c.l.b16 %v173
    %v238 = vunpack.c.h.b16 %v173
    %v239 = vunpack.c.l.b16 %v174
    %v240 = vunpack.c.h.b16 %v174
    %v241 = vunpack.c.l.b16 %v175
    %v242 = vunpack.c.h.b16 %v175
    %v243 = vunpack.c.l.b16 %v176
    %v244 = vunpack.c.h.b16 %v176
    %v245 = vunpack.c.l.b16 %v177
    %v246 = vunpack.c.h.b16 %v177
    %v247 = vunpack.c.l.b16 %v178
    %v248 = vunpack.c.h.b16 %v178
    %v249 = vunpack.c.l.b16 %v179
    %v250 = vunpack.c.h.b16 %v179
    %v251 = vunpack.c.l.b16 %v180
    %v252 = vunpack.c.h.b16 %v180
    %v253 = vunpack.c.l.b16 %v181
    %v254 = vunpack.c.h.b16 %v181
    %v255 = vunpack.c.l.b16 %v182
    %v256 = vunpack.c.h.b16 %v182
    %v257 = vunpack.c.l.b16 %v183
    %v258 = vunpack.c.h.b16 %v183
    %v259 = vunpack.c.l.b16 %v184
    %v260 = vunpack.c.h.b16 %v184
    %v261 = vunpack.c.l.b16 %v185
    %v262 = vunpack.c.h.b16 %v185
    %v263 = vunpack.c.l.b16 %v186
    %v264 = vunpack.c.h.b16 %v186
    %v265 = vunpack.c.l.b16 %v187
    %v266 = vunpack.c.h.b16 %v187
    %v267 = vunpack.c.l.b16 %v188
    %v268 = vunpack.c.h.b16 %v188
    %v269 = vunpack.c.l.b16 %v189
    %v270 = vunpack.c.h.b16 %v189
    %v271 = vunpack.c.l.b16 %v190
    %v272 = vunpack.c.h.b16 %v190
    %v273 = vunpack.c.l.b16 %v191
    %v274 = vunpack.c.h.b16 %v191
    %v275 = vunpack.c.l.b16 %v192
    %v276 = vunpack.c.h.b16 %v192
    %v277 = vunpack.c.l.b16 %v193
    %v278 = vunpack.c.h.b16 %v193
    %v279 = vunpack.c.l.b16 %v194
    %v280 = vunpack.c.h.b16 %v194
    %v281 = vunpack.c.l.b16 %v195
    %v282 = vunpack.c.h.b16 %v195
    %v283 = vunpack.c.l.b16 %v196
    %v284 = vunpack.c.h.b16 %v196
    %v285 = vunpack.c.l.b16 %v197
    %v286 = vunpack.c.h.b16 %v197
    %v287 = vunpack.c.l.b16 %v198
    %v288 = vunpack.c.h.b16 %v198
    %v289 = vunpack.c.l.b16 %v199
    %v290 = vunpack.c.h.b16 %v199
    %v291 = vunpack.c.l.b16 %v200
    %v292 = vunpack.c.h.b16 %v200
    %v293 = vunpack.c.l.b16 %v201
    %v294 = vunpack.c.h.b16 %v201
    %v295 = vunpack.c.l.b16 %v202
    %v296 = vunpack.c.h.b16 %v202
    %v297 = vunpack.c.l.b16 %v203
    %v298 = vunpack.c.h.b16 %v203
    %v299 = vunpack.c.l.b16 %v204
    %v300 = vunpack.c.h.b16 %v204
    %v301 = vpack.c.b16 %v239, %v237
    %v302 = vpack.c.b16 %v240, %v238
    %v303 = vpack.c.b16 %v243, %v241
    %v304 = vpack.c.b16 %v244, %v242
    %v305 = vpack.c.b16 %v247, %v245
    %v306 = vpack.c.b16 %v248, %v246
    %v307 = vpack.c.b16 %v251, %v249
    %v308 = vpack.c.b16 %v252, %v250
    %v309 = vpack.c.b16 %v255, %v253
    %v310 = vpack.c.b16 %v256, %v254
    %v311 = vpack.c.b16 %v259, %v257
    %v312 = vpack.c.b16 %v260, %v258
    %v313 = vpack.c.b16 %v263, %v261
    %v314 = vpack.c.b16 %v264, %v262
    %v315 = vpack.c.b16 %v267, %v265
    %v316 = vpack.c.b16 %v268, %v266
    %v317 = vpack.c.b16 %v271, %v269
    %v318 = vpack.c.b16 %v272, %v270
    %v319 = vpack.c.b16 %v275, %v273
    %v320 = vpack.c.b16 %v276, %v274
    %v321 = vpack.c.b16 %v279, %v277
    %v322 = vpack.c.b16 %v280, %v278
    %v323 = vpack.c.b16 %v283, %v281
    %v324 = vpack.c.b16 %v284, %v282
    %v325 = vpack.c.b16 %v287, %v285
    %v326 = vpack.c.b16 %v288, %v286
    %v327 = vpack.c.b16 %v291, %v289
    %v328 = vpack.c.b16 %v292, %v290
    %v329 = vpack.c.b16 %v295, %v293
    %v330 = vpack.c.b16 %v296, %v294
    %v331 = vpack.c.b16 %v299, %v297
    %v332 = vpack.c.b16 %v300, %v298
    %365 = vmatprep.subr.bf16.mxu0 %v302
    %366 = vmatpush1.bf16.msra.mxu0 %v301
    %367 = vmatprep.subr.bf16.mxu0 %v304
    %368 = vmatpush1.bf16.msra.mxu0 %v303
    %369 = vmatprep.subr.bf16.mxu0 %v306
    %370 = vmatpush1.bf16.msra.mxu0 %v305
    %371 = vmatprep.subr.bf16.mxu0 %v308
    %372 = vmatpush1.bf16.msra.mxu0 %v307
    %373 = vmatprep.subr.bf16.mxu0 %v310
    %374 = vmatpush1.bf16.msra.mxu0 %v309
    %375 = vmatprep.subr.bf16.mxu0 %v312
    %376 = vmatpush1.bf16.msra.mxu0 %v311
    %377 = vmatprep.subr.bf16.mxu0 %v314
    %378 = vmatpush1.bf16.msra.mxu0 %v313
    %379 = vmatprep.subr.bf16.mxu0 %v316
    %380 = vmatpush1.bf16.msra.mxu0 %v315
    %381 = vmatprep.subr.bf16.mxu0 %v318
    %382 = vmatpush1.bf16.msra.mxu0 %v317
    %383 = vmatprep.subr.bf16.mxu0 %v320
    %384 = vmatpush1.bf16.msra.mxu0 %v319
    %385 = vmatprep.subr.bf16.mxu0 %v322
    %386 = vmatpush1.bf16.msra.mxu0 %v321
    %387 = vmatprep.subr.bf16.mxu0 %v324
    %388 = vmatpush1.bf16.msra.mxu0 %v323
    %389 = vmatprep.subr.bf16.mxu0 %v326
    %390 = vmatpush1.bf16.msra.mxu0 %v325
    %391 = vmatprep.subr.bf16.mxu0 %v328
    %392 = vmatpush1.bf16.msra.mxu0 %v327
    %393 = vmatprep.subr.bf16.mxu0 %v330
    %394 = vmatpush1.bf16.msra.mxu0 %v329
    %395 = vmatprep.subr.bf16.mxu0 %v332
    %396 = vmatpush1.bf16.msra.mxu0 %v331
    %397 = vmatprep.mubr.bf16.mxu0 %v172
    %398 = vmatmul.mubr.bf16.gmra.mrb[0].mxu0 %v171
    %v399 = vpop.f32.mrb[0].mxu0
    %v400 = vadd.f32 0.0, %v399
    %v401 = vpop.f32.mrb[0].mxu0
    %v402 = vadd.f32 0.0, %v401
    %v403 = vpop.f32.mrb[0].mxu0
    %v404 = vpop.f32.mrb[0].mxu0
    %405 = vdwg.mxu0
    %v406 = vpack.c.bf16 %v400, %v400
    %v407 = vpack.c.bf16 %v402, %v402
    %v408 = vld [vmem:[%s4] sm:$0x3]
    %v410 = vlaneseq
    %v411 = vshrl.u32 %v410, 7
    %v412 = vsub.s32 0, %v411
    %v413 = vrot.slane %v408, %v412
    %v414 = vlaneseq
    %v415 = vshrl.u32 %v414, 7
    %v416 = vsub.s32 1, %v415
    %v417 = vrot.slane %v408, %v416
    %v420 = vpack.c.bf16 %v413, %v413
    %v421 = vpack.c.bf16 %v417, %v417
    %v423 = vpack.i.b16 %v420, %v420
    %v425 = vlaneseq
    %v426 = vshrl.u32 %v425, 7
    %v427 = vsub.s32 0, %v426
    %v428 = vrot.slane %v423, %v427
    %v430 = vpack.i.b16 %v421, %v421
    %v432 = vlaneseq
    %v433 = vshrl.u32 %v432, 7
    %v434 = vsub.s32 0, %v433
    %v435 = vrot.slane %v430, %v434
    %v436 = vadd.bf16 %v406, %v428
    %v437 = vadd.bf16 %v407, %v435
    %v438 = vmax.bf16 %v436, 0
    %v439 = vmax.bf16 %v437, 0
    %v440 = vunpack.c.l.bf16 %v438
    %v441 = vunpack.c.l.bf16 %v439
    %v442 = vld [vmem:[%s5] sm:$0x3]
    %v444 = vlaneseq
    %v445 = vshrl.u32 %v444, 7
    %v446 = vsub.s32 0, %v445
    %v447 = vrot.slane %v442, %v446
    %v448 = vlaneseq
    %v449 = vshrl.u32 %v448, 7
    %v450 = vsub.s32 1, %v449
    %v451 = vrot.slane %v442, %v450
    %v454 = vmul.f32 %v440, %v447
    %v455 = vmul.f32 %v441, %v451
    %v456 = vadd.f32 %v454, %v455
    %457 = vadd.xlane.f32.xlu0 %v456
    %v458 = vpop.xlane.xlu0 %457
    %v459 = vld [vmem:[#allocation2] sm:$0x1]
    %v461 = vlaneseq
    %v462 = vshrl.u32 %v461, 7
    %v463 = vsub.s32 0, %v462
    %v464 = vrot.slane %v459, %v463
    %v466 = vadd.f32 %v458, %v464
    %vm467 = vcmask 7168
    %468 = vst.msk [vmem:[%s7] sm:$0xff] %vm467, %v466
    // Predicated region
    $region42: #{tpu_custom_call.1} parent=1 // pred_check
      _
    $region43: #{tpu_custom_call.1} parent=1 // pred_check_branch
      %470 = sbr.rel (0) target = $region45
    $region44: #{tpu_custom_call.1} parent=1 // pred_region
      _
    $region45: #{tpu_custom_call.1} parent=1 // pred_fallthru
      _
    // Predicated region
    $region46: #{tpu_custom_call.1} parent=1 // pred_check
      _
    $region47: #{tpu_custom_call.1} parent=1 // pred_check_branch
      %472 = sbr.rel (0) target = $region49
    $region48: #{tpu_custom_call.1} parent=1 // pred_region
      _
    $region49: #{tpu_custom_call.1} parent=1 // pred_fallthru
      _
    %473 = vsyncpa [#allocation4], 1
    %474 = vsyncpa [#allocation6], 1

</llo_original>
